<compile_context>
chip_gen: v7x
topology: tpu7x:2x2x1
jax: 0.10.0
libtpu: 0.0.40
codegen_flags: <defaults>
</compile_context>

<pallas_src>
import functools

import jax
import jax.numpy as jnp
from jax.experimental import pallas as pl
from jax.experimental.pallas import tpu as pltpu

_EPS = 1e-8
# Clamping the squared norm at eps^2 == clamping the norm at eps (sqrt monotone).
_EPS_SQ = _EPS * _EPS


def _cosine_loss_kernel(x_ref, y_ref, o_ref, acc_ref, *,
                        inv_n, n_rows, block_rows, mask_tail):
    i = pl.program_id(0)  # reduction (batch-tile) axis

    @pl.when(i == 0)
    def _init():
        acc_ref[...] = jnp.zeros_like(acc_ref)

    x = x_ref[...].astype(jnp.float32)
    y = y_ref[...].astype(jnp.float32)

    dot = jnp.sum(x * y, axis=1, keepdims=True)   # (TB, 1)
    sx = jnp.sum(x * x, axis=1, keepdims=True)    # (TB, 1)
    sy = jnp.sum(y * y, axis=1, keepdims=True)    # (TB, 1)

    # 1 / max(||x||, eps) == rsqrt(max(||x||^2, eps^2))  -> EUP, no sqrt + div.
    inv_nx = jax.lax.rsqrt(jnp.maximum(sx, _EPS_SQ))
    inv_ny = jax.lax.rsqrt(jnp.maximum(sy, _EPS_SQ))
    cos = dot * inv_nx * inv_ny                   # (TB, 1)

    if mask_tail:
        # Ragged tail: rows >= n_rows in the last block hold unspecified data.
        # jnp.where is a select, so NaN/Inf in masked-off rows cannot leak.
        row = i * block_rows + jax.lax.broadcasted_iota(jnp.int32, cos.shape, 0)
        cos = jnp.where(row < n_rows, cos, 0.0)

    acc_ref[...] += jnp.sum(cos, axis=0, keepdims=True)   # (1, 1) running sum

    @pl.when(i == pl.num_programs(0) - 1)
    def _finalize():
        # Write (-sum(cos) / N) once, lane-dense, into the (8, 128) out block.
        val = -acc_ref[...] * inv_n                # (1, 1)
        o_ref[...] = jnp.broadcast_to(val, o_ref.shape).astype(jnp.float32)


def _round_up(a, m):
    return (a + m - 1) // m * m


def _vmem_capacity_bytes():
    # Per-generation VMEM query; conservative fallback (v7x per-core VMEM) if
    # the query is unavailable (e.g. interpret mode / CPU tracing).
    try:
        return int(pltpu.get_tpu_info().vmem_capacity_bytes)
    except Exception:
        return 64 * 1024 * 1024


def cosine_loss(embeddings: jax.Array, target: jax.Array, *,
                block_rows: int | None = None) -> jax.Array:
    """Negative mean cosine similarity (dim=1, eps=1e-8) via a Pallas TPU kernel."""
    assert embeddings.shape == target.shape and embeddings.ndim == 2
    n, d = embeddings.shape
    dtype = embeddings.dtype
    itemsize = jnp.dtype(dtype).itemsize
    # Second-minor block multiple: 8 for f32, 16 for bf16, 32 for 1-byte dtypes.
    row_mult = max(8, 32 // itemsize)
    # VMEM layout pads the lane (last) dim to 128; account for it in the budget.
    d_pad = _round_up(d, 128)

    # Input double-buffer budget: ~1/4 of physical VMEM for
    # (2 inputs x 2 pipeline buffers x TB x d_pad) -> 8 MiB blocks on
    # v5e/v6e (128 MiB VMEM), 4 MiB blocks on v7x (64 MiB VMEM).  Both are
    # comfortably past the ~2 MiB knee of the measured HBM-roofline curve,
    # while leaving headroom for f32 upcasts / elementwise temporaries.
    vmem_cap = _vmem_capacity_bytes()
    budget_bytes = max(8 * 1024 * 1024, vmem_cap // 4)

    tb_cap = max(row_mult, budget_bytes // (2 * 2 * d_pad * itemsize))
    if block_rows is not None:   # explicit override (tests / tuning)
        tb_cap = max(row_mult, block_rows)
    tb = min(tb_cap, _round_up(n, row_mult))
    tb = max(row_mult, (tb // row_mult) * row_mult)

    num_tiles = pl.cdiv(n, tb)
    mask_tail = (n % tb) != 0

    # Scoped-VMEM limit: input double-buffer + generous headroom for in-kernel
    # f32 temporaries, capped below physical capacity.
    in_buf_bytes = 2 * 2 * tb * d_pad * itemsize
    vmem_limit = min(vmem_cap * 7 // 8, 2 * in_buf_bytes + (16 << 20))

    kernel = functools.partial(
        _cosine_loss_kernel,
        inv_n=1.0 / n,
        n_rows=n,
        block_rows=tb,
        mask_tail=mask_tail,
    )

    out = pl.pallas_call(
        kernel,
        out_shape=jax.ShapeDtypeStruct((8, 128), jnp.float32),
        grid_spec=pltpu.PrefetchScalarGridSpec(
            num_scalar_prefetch=0,
            grid=(num_tiles,),
            in_specs=[
                pl.BlockSpec((tb, d), lambda i: (i, 0)),
                pl.BlockSpec((tb, d), lambda i: (i, 0)),
            ],
            out_specs=pl.BlockSpec((8, 128), lambda i: (0, 0)),
            scratch_shapes=[pltpu.VMEM((1, 1), jnp.float32)],
        ),
        compiler_params=pltpu.CompilerParams(
            dimension_semantics=("arbitrary",),
            vmem_limit_bytes=int(vmem_limit),
        ),
        cost_estimate=pl.CostEstimate(
            flops=6 * n * d,
            transcendentals=2 * n,
            bytes_accessed=2 * n * d * itemsize + 8 * 128 * 4,
        ),
    )(embeddings, target)

    return out[0, 0]


def cosine_loss_ref(embeddings, target):
    x = embeddings.astype(jnp.float32)
    y = target.astype(jnp.float32)
    dot = jnp.sum(x * y, axis=1)
    nx = jnp.sqrt(jnp.sum(x * x, axis=1))
    ny = jnp.sqrt(jnp.sum(y * y, axis=1))
    cos = dot / (jnp.maximum(nx, _EPS) * jnp.maximum(ny, _EPS))
    return -jnp.mean(cos)


if __name__ == "__main__":
    key = jax.random.PRNGKey(0)
    k1, k2, k3, k4 = jax.random.split(key, 4)

    # Small, module-consistent shapes: batch=8 rows of hidden=32 embeddings.
    emb = jax.random.normal(k1, (8, 32), dtype=jnp.float32)
    tgt = jax.random.normal(k2, (8, 32), dtype=jnp.float32)
    loss = cosine_loss(emb, tgt)
    jax.block_until_ready(loss)
    ref = cosine_loss_ref(emb, tgt)
    assert jnp.allclose(loss, ref, atol=1e-5, rtol=1e-5), (loss, ref)

    # Multi-tile path with a ragged tail (100 % 16 != 0): exercises the
    # pipelined reduction and the in-kernel tail mask (no host-side padding).
    emb2 = jax.random.normal(k3, (100, 128), dtype=jnp.float32)
    tgt2 = jax.random.normal(k4, (100, 128), dtype=jnp.float32)
    loss2 = cosine_loss(emb2, tgt2, block_rows=16)
    jax.block_until_ready(loss2)
    ref2 = cosine_loss_ref(emb2, tgt2)
    assert jnp.allclose(loss2, ref2, atol=1e-5, rtol=1e-5), (loss2, ref2)

    # bf16 inputs (halves HBM traffic; kernel still accumulates in f32),
    # default VMEM-budget-derived tile size.
    emb3 = emb2.astype(jnp.bfloat16)
    tgt3 = tgt2.astype(jnp.bfloat16)
    loss3 = cosine_loss(emb3, tgt3)
    jax.block_until_ready(loss3)
    ref3 = cosine_loss_ref(emb3, tgt3)
    assert jnp.allclose(loss3, ref3, atol=1e-5, rtol=1e-5), (loss3, ref3)

    print("KERNEL_OK")
</pallas_src>

<mosaic_0001>
module attributes {stable_mosaic.version = 11 : i64} {
  func.func @_cosine_loss_kernel(%arg0: i32, %arg1: memref<8x32xf32, #tpu.memory_space<vmem>>, %arg2: memref<8x32xf32, #tpu.memory_space<vmem>>, %arg3: memref<8x128xf32, #tpu.memory_space<vmem>>, %arg4: memref<1x1xf32, #tpu.memory_space<vmem>>) attributes {dimension_semantics = [#tpu.dimension_semantics<arbitrary>], iteration_bounds = array<i64: 1>, scalar_prefetch = 0 : i64, scratch_operands = 1 : i64, tpu.core_type = #tpu.core_type<tc>, window_params = [{transform_indices = @transform_0, window_bounds = array<i64: 8, 32>}, {transform_indices = @transform_1, window_bounds = array<i64: 8, 32>}, {pipeline_mode = #tpu.pipeline_mode<synchronous>, transform_indices = @transform_2, window_bounds = array<i64: 8, 128>}]} {
    %c0_i32 = arith.constant 0 : i32
    %0 = arith.cmpi eq, %arg0, %c0_i32 : i32
    %1 = arith.extui %0 : i1 to i32
    %c0_i32_0 = arith.constant 0 : i32
    %2 = arith.cmpi ne, %1, %c0_i32_0 : i32
    scf.if %2 {
      %cst_15 = arith.constant 0.000000e+00 : f32
      %30 = vector.broadcast %cst_15 : f32 to vector<1x1xf32>
      %c0_16 = arith.constant 0 : index
      %c0_17 = arith.constant 0 : index
      %31 = vector.load %arg4[%c0_16, %c0_17] : memref<1x1xf32, #tpu.memory_space<vmem>>, vector<1x1xf32>
      tpu.vector_store %arg4[%c0_16, %c0_17], %30 {strides = array<i32>} : memref<1x1xf32, #tpu.memory_space<vmem>>, vector<1x1xf32>,
    } else {
    }
    %c0 = arith.constant 0 : index
    %c0_1 = arith.constant 0 : index
    %3 = vector.load %arg1[%c0, %c0_1] : memref<8x32xf32, #tpu.memory_space<vmem>>, vector<8x32xf32>
    %c0_2 = arith.constant 0 : index
    %c0_3 = arith.constant 0 : index
    %4 = vector.load %arg2[%c0_2, %c0_3] : memref<8x32xf32, #tpu.memory_space<vmem>>, vector<8x32xf32>
    %5 = arith.mulf %3, %4 : vector<8x32xf32>
    %cst = arith.constant dense<0.000000e+00> : vector<8xf32>
    %6 = vector.multi_reduction <add>, %5, %cst [1] : vector<8x32xf32> to vector<8xf32>
    %7 = vector.shape_cast %6 : vector<8xf32> to vector<8x1xf32>
    %8 = arith.mulf %3, %3 : vector<8x32xf32>
    %cst_4 = arith.constant dense<0.000000e+00> : vector<8xf32>
    %9 = vector.multi_reduction <add>, %8, %cst_4 [1] : vector<8x32xf32> to vector<8xf32>
    %10 = vector.shape_cast %9 : vector<8xf32> to vector<8x1xf32>
    %11 = arith.mulf %4, %4 : vector<8x32xf32>
    %cst_5 = arith.constant dense<0.000000e+00> : vector<8xf32>
    %12 = vector.multi_reduction <add>, %11, %cst_5 [1] : vector<8x32xf32> to vector<8xf32>
    %13 = vector.shape_cast %12 : vector<8xf32> to vector<8x1xf32>
    %cst_6 = arith.constant 1.000000e-16 : f32
    %14 = vector.broadcast %cst_6 : f32 to vector<8x1xf32>
    %15 = arith.maximumf %10, %14 : vector<8x1xf32>
    %16 = math.rsqrt %15 : vector<8x1xf32>
    %cst_7 = arith.constant 1.000000e-16 : f32
    %17 = vector.broadcast %cst_7 : f32 to vector<8x1xf32>
    %18 = arith.maximumf %13, %17 : vector<8x1xf32>
    %19 = math.rsqrt %18 : vector<8x1xf32>
    %20 = arith.mulf %7, %16 : vector<8x1xf32>
    %21 = arith.mulf %20, %19 : vector<8x1xf32>
    %c0_8 = arith.constant 0 : index
    %c0_9 = arith.constant 0 : index
    %22 = vector.load %arg4[%c0_8, %c0_9] : memref<1x1xf32, #tpu.memory_space<vmem>>, vector<1x1xf32>
    %cst_10 = arith.constant dense<0.000000e+00> : vector<1xf32>
    %23 = vector.multi_reduction <add>, %21, %cst_10 [0] : vector<8x1xf32> to vector<1xf32>
    %24 = vector.shape_cast %23 : vector<1xf32> to vector<1x1xf32>
    %25 = arith.addf %22, %24 : vector<1x1xf32>
    %c0_11 = arith.constant 0 : index
    %c0_12 = arith.constant 0 : index
    %26 = vector.load %arg4[%c0_11, %c0_12] : memref<1x1xf32, #tpu.memory_space<vmem>>, vector<1x1xf32>
    tpu.vector_store %arg4[%c0_11, %c0_12], %25 {strides = array<i32>} : memref<1x1xf32, #tpu.memory_space<vmem>>, vector<1x1xf32>,
    %c0_i32_13 = arith.constant 0 : i32
    %27 = arith.cmpi eq, %arg0, %c0_i32_13 : i32
    %28 = arith.extui %27 : i1 to i32
    %c0_i32_14 = arith.constant 0 : i32
    %29 = arith.cmpi ne, %28, %c0_i32_14 : i32
    scf.if %29 {
      %c0_15 = arith.constant 0 : index
      %c0_16 = arith.constant 0 : index
      %30 = vector.load %arg4[%c0_15, %c0_16] : memref<1x1xf32, #tpu.memory_space<vmem>>, vector<1x1xf32>
      %cst_17 = arith.constant 0.000000e+00 : f32
      %31 = vector.broadcast %cst_17 : f32 to vector<1x1xf32>
      %32 = arith.subf %31, %30 : vector<1x1xf32>
      %cst_18 = arith.constant 1.250000e-01 : f32
      %33 = vector.broadcast %cst_18 : f32 to vector<1x1xf32>
      %34 = arith.mulf %32, %33 : vector<1x1xf32>
      %35 = vector.shape_cast %34 : vector<1x1xf32> to vector<1x1xf32>
      %36 = vector.broadcast %35 : vector<1x1xf32> to vector<8x128xf32>
      %c0_19 = arith.constant 0 : index
      %c0_20 = arith.constant 0 : index
      %37 = vector.load %arg3[%c0_19, %c0_20] : memref<8x128xf32, #tpu.memory_space<vmem>>, vector<8x128xf32>
      tpu.vector_store %arg3[%c0_19, %c0_20], %36 {strides = array<i32>} : memref<8x128xf32, #tpu.memory_space<vmem>>, vector<8x128xf32>,
    } else {
    }
    return
  }
  func.func @transform_0(%arg0: i32) -> (i32, i32) {
    %c0_i32 = arith.constant 0 : i32
    %c0_i32_0 = arith.constant 0 : i32
    return %arg0, %c0_i32 : i32, i32
  }
  func.func @transform_1(%arg0: i32) -> (i32, i32) {
    %c0_i32 = arith.constant 0 : i32
    %c0_i32_0 = arith.constant 0 : i32
    return %arg0, %c0_i32 : i32, i32
  }
  func.func @transform_2(%arg0: i32) -> (i32, i32) {
    %c0_i32 = arith.constant 0 : i32
    %c0_i32_0 = arith.constant 0 : i32
    %c0_i32_1 = arith.constant 0 : i32
    return %c0_i32, %c0_i32_0 : i32, i32
  }
}

</mosaic_0001>

<llo_original>
// kernel: tpu_custom_call.1
$region0: #{tpu_custom_call.1}
  #allocation0 [shape = 'u32[]', space=smem, size = 0x4, offset = 0x4, fixed_abs, tag = 'smem constant byte address 0x4 - core index']
  #allocation1 [shape = 'u32[144,128]{1,0:T(1,128)}', space=vmem, size = 0x12000, scoped, tag = 'internal scratch']
  #allocation2 [shape = 'f32[1,1]{1,0:T(1,128)}', space=vmem, size = 0x200, scoped, tag = 'scratch operand']
  %s0 = inlined_call_operand.hbm [shape: f32[8,32], index: 0, kind: input, shape index: {}]
  %s1 = inlined_call_operand.hbm [shape: f32[8,32], index: 1, kind: input, shape index: {}]
  %s2 = inlined_call_operand.hbm [shape: f32[8,128], index: 2, kind: output, shape index: {}]
  %s3 = sld [smem:[#allocation0]]
  $region34: #{tpu_custom_call.1} parent=0
    _
  %s5 = ssub.s32 1, %s3
  %s6 = scalar_select 0, %s5, %s3
  $region1: #{tpu_custom_call.1} parent=0
    #allocation3 [shape = 'u8[4096]{0}', space=vmem, size = 0x1000, scoped, tag = 'input window, operand 0, single buffered']
    #allocation4 [shape = 's32[1]{0}', space=sflag, size = 0x4, scoped, tag = 'scoped memory for tpu_custom_call.1']
    #allocation5 [shape = 's32[1]{0}', space=sflag, size = 0x4, scoped, tag = 'scoped memory for tpu_custom_call.1']
    #allocation6 [shape = 'u8[4096]{0}', space=vmem, size = 0x1000, scoped, tag = 'input window, operand 1, single buffered']
    #allocation7 [shape = 's32[1]{0}', space=sflag, size = 0x4, scoped, tag = 'scoped memory for tpu_custom_call.1']
    #allocation8 [shape = 'u8[4096]{0}', space=vmem, size = 0x1000, scoped, tag = 'output window, operand 0, single buffered']
    %7 = vsyncpa [#allocation4], 0
    %8 = vsyncpa [#allocation7], 0
    %9 = vsyncpa [#allocation5], 0
    // Predicated region
    $region2: #{tpu_custom_call.1} parent=1 // pred_check
      _
    $region3: #{tpu_custom_call.1} parent=1 // pred_check_branch
      %11 = sbr.rel (0) target = $region5
    $region4: #{tpu_custom_call.1} parent=1 // pred_region
      %s13 = ssub.s32 128, 128
      %14 = vsyncadd [#allocation4], %s13
      %s16 = sshll.u32 [#allocation3], 4
      %s17 = int_to_ptr.vmem [resolvable:$true] %s16
      %19 = dma.hbm_to_vmem [thread:$0]  %s0, 128, %s17, [#allocation4]
    $region5: #{tpu_custom_call.1} parent=1 // pred_fallthru
      _
    // Predicated region
    $region6: #{tpu_custom_call.1} parent=1 // pred_check
      _
    $region7: #{tpu_custom_call.1} parent=1 // pred_check_branch
      %21 = sbr.rel (0) target = $region9
    $region8: #{tpu_custom_call.1} parent=1 // pred_region
      %s23 = ssub.s32 128, 128
      %24 = vsyncadd [#allocation7], %s23
      %s26 = sshll.u32 [#allocation6], 4
      %s27 = int_to_ptr.vmem [resolvable:$true] %s26
      %29 = dma.hbm_to_vmem [thread:$0]  %s1, 128, %s27, [#allocation7]
    $region9: #{tpu_custom_call.1} parent=1 // pred_fallthru
      _
    // Predicated region
    $region10: #{tpu_custom_call.1} parent=1 // pred_check
      _
    $region11: #{tpu_custom_call.1} parent=1 // pred_check_branch
      %31 = sbr.rel (0) target = $region13
    $region12: #{tpu_custom_call.1} parent=1 // pred_region
      %32 = dma.done [#allocation4], 128
    $region13: #{tpu_custom_call.1} parent=1 // pred_fallthru
      _
    // Predicated region
    $region14: #{tpu_custom_call.1} parent=1 // pred_check
      _
    $region15: #{tpu_custom_call.1} parent=1 // pred_check_branch
      %34 = sbr.rel (0) target = $region17
    $region16: #{tpu_custom_call.1} parent=1 // pred_region
      %35 = dma.done [#allocation7], 128
    $region17: #{tpu_custom_call.1} parent=1 // pred_fallthru
      _
    %p36 = scmp.eq.s32.totalorder 0, 0
    // Predicated region
    $region18: #{tpu_custom_call.1} parent=1 // pred_check
      %p37 = pneg %p36
    $region19: #{tpu_custom_call.1} parent=1 // pred_check_branch
      %39 = sbr.rel (%p37) target = $region21
    $region20: #{tpu_custom_call.1} parent=1 // pred_region
      %vm40 = vcmask 0
      %41 = vst.msk [vmem:[#allocation2] sm:$0x1] %vm40, 0.0
    $region21: #{tpu_custom_call.1} parent=1 // pred_fallthru
      _
    %v42 = vld [vmem:[#allocation3] sm:$0xff]
    %v43 = vld [vmem:[#allocation6] sm:$0xff]
    %v44 = vmul.f32 %v42, %v43
    %vm45 = vcmask 261120
    %v46 = vsel %vm45, %v44, 0.0
    %47 = vadd.xlane.f32.xlu0 %v46
    %v48 = vpop.xlane.xlu0 %47
    %v49 = vmul.f32 %v42, %v42
    %v50 = vsel %vm45, %v49, 0.0
    %51 = vadd.xlane.f32.xlu0 %v50
    %v52 = vpop.xlane.xlu0 %51
    %v53 = vmul.f32 %v43, %v43
    %v54 = vsel %vm45, %v53, 0.0
    %55 = vadd.xlane.f32.xlu0 %v54
    %v56 = vpop.xlane.xlu0 %55
    %v57 = vmax.f32 %v52, 1e-16
    %v58 = vrsqrt.pop %v57
    %v59 = vmax.f32 %v56, 1e-16
    %v60 = vrsqrt.pop %v59
    %v61 = vmul.f32 %v48, %v58
    %v62 = vmul.f32 %v61, %v60
    %v63 = vld [vmem:[#allocation2] sm:$0x1]
    %v64 = vrot.slane %v62, 4
    %v65 = vadd.f32 %v62, %v64
    %v66 = vrot.slane %v65, 2
    %v67 = vadd.f32 %v65, %v66
    %v68 = vrot.slane %v67, 1
    %v69 = vadd.f32 %v67, %v68
    %v70 = vadd.f32 %v63, %v69
    %vm71 = vcmask 0
    %72 = vst.msk [vmem:[#allocation2] sm:$0x1] %vm71, %v70
    // Predicated region
    $region22: #{tpu_custom_call.1} parent=1 // pred_check
      %p73 = pneg %p36
    $region23: #{tpu_custom_call.1} parent=1 // pred_check_branch
      %75 = sbr.rel (%p73) target = $region25
    $region24: #{tpu_custom_call.1} parent=1 // pred_region
      %v76 = vld [vmem:[#allocation2] sm:$0x1]
      %v77 = vsub.f32 0.0, %v76
      %v78 = vmul.f32 %v77, 0.125
      %v80 = vlaneseq
      %v81 = vshrl.u32 %v80, 7
      %v82 = vsub.s32 0, %v81
      %v83 = vrot.slane %v78, %v82
      %84 = vset.pattern.permute.xlu0 0
      %85 = vperm.xlu0 %84, %v83
      %v86 = vpop.permute.xlu0 %85
      %88 = vst [vmem:[#allocation8] sm:$0xff] %v86
    $region25: #{tpu_custom_call.1} parent=1 // pred_fallthru
      _
    // Predicated region
    $region26: #{tpu_custom_call.1} parent=1 // pred_check
      _
    $region27: #{tpu_custom_call.1} parent=1 // pred_check_branch
      %90 = sbr.rel (0) target = $region29
    $region28: #{tpu_custom_call.1} parent=1 // pred_region
      %s92 = ssub.s32 128, 128
      %93 = vsyncadd [#allocation5], %s92
      %s95 = sshll.u32 [#allocation8], 4
      %s96 = int_to_ptr.vmem [resolvable:$true] %s95
      %98 = dma.vmem_to_hbm [thread:$0]  %s96, 128, %s2, [#allocation5]
    $region29: #{tpu_custom_call.1} parent=1 // pred_fallthru
      _
    // Predicated region
    $region30: #{tpu_custom_call.1} parent=1 // pred_check
      _
    $region31: #{tpu_custom_call.1} parent=1 // pred_check_branch
      %100 = sbr.rel (0) target = $region33
    $region32: #{tpu_custom_call.1} parent=1 // pred_region
      %101 = dma.done [#allocation5], 128
    $region33: #{tpu_custom_call.1} parent=1 // pred_fallthru
      _
    %102 = vsyncpa [#allocation4], 1
    %103 = vsyncpa [#allocation7], 1
    %104 = vsyncpa [#allocation5], 1

</llo_original>
